<compile_context>
chip_gen: v5e
topology: v5e:2x2
jax: 0.10.0
libtpu: 0.0.40
codegen_flags: <defaults>
</compile_context>

<pallas_src>
import jax
import jax.numpy as jnp
from jax.experimental import pallas as pl
from jax.experimental.pallas import tpu as pltpu


def _cdiv(a, b):
    return -(-a // b)


# ---------------------------------------------------------------------------
# Kernel body (shared by both dispatch paths).
# ---------------------------------------------------------------------------
def _bce_partial_kernel(label_ref, x_ref, t_ref, out_ref, acc_ref):
    """Accumulates 4 lane-wise partials over the grid's work axis.

    x_ref, t_ref: (ROWS, LANES) logits / targets tiles (any dtype, upcast here).
    out_ref:      (4, LANES) per-core partials [s_pos, s_neg, n_pos, n_neg].
    acc_ref:      (4, LANES) f32 VMEM scratch accumulator.
    """
    del label_ref  # only consumed by the BlockSpec index_maps
    w = pl.program_id(1)

    @pl.when(w == 0)
    def _init():
        acc_ref[...] = jnp.zeros_like(acc_ref)

    x = x_ref[...].astype(jnp.float32)
    t = t_ref[...].astype(jnp.float32)

    # Numerically stable binary_cross_entropy_with_logits (per element).
    bce = jnp.maximum(x, 0.0) - x * t + jnp.log1p(jnp.exp(-jnp.abs(x)))

    pos = t == 1.0
    neg = t == 0.0

    # Per-step sublane reduction (XLU slot, idle here) -> tiny accumulator.
    s_pos = jnp.sum(jnp.where(pos, bce, 0.0), axis=0, keepdims=True)
    s_neg = jnp.sum(jnp.where(neg, bce, 0.0), axis=0, keepdims=True)
    n_pos = jnp.sum(pos.astype(jnp.float32), axis=0, keepdims=True)
    n_neg = jnp.sum(neg.astype(jnp.float32), axis=0, keepdims=True)
    acc_ref[...] += jnp.concatenate([s_pos, s_neg, n_pos, n_neg], axis=0)

    @pl.when(w == pl.num_programs(1) - 1)
    def _finalize():
        out_ref[...] = acc_ref[...]


# ---------------------------------------------------------------------------
# Sizing helpers.
# ---------------------------------------------------------------------------
def _vmem_capacity_bytes():
    try:
        return int(pltpu.get_tpu_info().vmem_capacity_bytes)
    except Exception:
        return 64 * 1024 * 1024  # conservative (v7x-sized) default


def _compiler_params(tile_bytes, vmem_cap):
    # 2 input arrays x 2 pipeline buffers per step + outputs/scratch/margin.
    need = 4 * tile_bytes + (4 << 20)
    limit = int(min(max(need, 32 << 20), (vmem_cap * 3) // 4))
    return pltpu.CompilerParams(
        dimension_semantics=("parallel", "arbitrary"),
        vmem_limit_bytes=limit,
    )


def _cost_estimate(n_elems, x_bytes, t_bytes):
    return pl.CostEstimate(
        flops=int(15 * n_elems),
        transcendentals=int(2 * n_elems),
        bytes_accessed=int(n_elems * (x_bytes + t_bytes) + 4096),
    )


# ---------------------------------------------------------------------------
# Dispatch path 1: small per-ROI planes (step-overhead bound).
# ---------------------------------------------------------------------------
def _partials_small(bd_pre, bd_gt, label, tile_budget, vmem_cap):
    """Pre-gather the label channel (one XLA gather), flatten all ROIs onto a
    lane-dense (rows, 128) slab, and process many ROIs per grid step."""
    N, C, H, W = bd_pre.shape
    HW = H * W
    total = N * HW
    S1 = 128

    x_flat = bd_pre[jnp.arange(N), label].reshape(-1)  # (N*HW,)
    t = bd_gt
    if t.dtype == jnp.bool_:
        t = t.astype(jnp.float32)
    t_flat = t.reshape(-1)

    xb = jnp.dtype(x_flat.dtype).itemsize
    tb = jnp.dtype(t_flat.dtype).itemsize
    row_bytes = S1 * (xb + tb)
    max_rows = max(8, (tile_budget // row_bytes) // 8 * 8)

    rows_needed = _cdiv(total, S1)
    TR = max(8, min(max_rows, _cdiv(rows_needed, 8) * 8))
    nw_work = _cdiv(rows_needed, TR)
    NC = 2 if nw_work >= 2 else 1  # keep both v7x TensorCores busy
    NW = _cdiv(nw_work, NC)
    rows_padded = NC * NW * TR

    pad = rows_padded * S1 - total
    if pad:
        # Target padded with 2 (neither pos nor neg) -> contributes nothing to
        # any of the four partials; logits padded with 0.
        x_flat = jnp.pad(x_flat, (0, pad))
        t_flat = jnp.pad(t_flat, (0, pad), constant_values=2)
    x2 = x_flat.reshape(rows_padded, S1)
    t2 = t_flat.reshape(rows_padded, S1)

    tile_bytes = TR * row_bytes
    grid_spec = pltpu.PrefetchScalarGridSpec(
        num_scalar_prefetch=1,
        grid=(NC, NW),
        in_specs=[
            pl.BlockSpec((TR, S1), lambda c, w, lab: (c * NW + w, 0)),
            pl.BlockSpec((TR, S1), lambda c, w, lab: (c * NW + w, 0)),
        ],
        out_specs=pl.BlockSpec((None, 4, S1), lambda c, w, lab: (c, 0, 0)),
        scratch_shapes=[pltpu.VMEM((4, S1), jnp.float32)],
    )
    return pl.pallas_call(
        _bce_partial_kernel,
        out_shape=jax.ShapeDtypeStruct((NC, 4, S1), jnp.float32),
        grid_spec=grid_spec,
        compiler_params=_compiler_params(tile_bytes, vmem_cap),
        cost_estimate=_cost_estimate(total, xb, tb),
    )(label.astype(jnp.int32), x2, t2)


# ---------------------------------------------------------------------------
# Dispatch path 2: large per-ROI planes (HBM-bandwidth bound).
# ---------------------------------------------------------------------------
def _partials_big(bd_pre, bd_gt, label, tile_budget, vmem_cap):
    """Data-dependent channel gather: the scalar-prefetched `label` drives the
    x index_map so only N of the C channel planes are ever read from HBM."""
    N, C, H, W = bd_pre.shape
    HW = H * W

    if HW % 128 == 0:
        S0, S1 = HW // 128, 128  # lane-dense spatial layout
    else:
        S0, S1 = H, W
        # TODO(synk): pad W up to 128 (sentinel target) when W << 128 to avoid
        # lane-masked vector ops/stores in this fallback layout.

    xb = jnp.dtype(bd_pre.dtype).itemsize
    tb = jnp.dtype(bd_gt.dtype).itemsize
    row_bytes = S1 * (xb + tb)
    max_rows = max(8, (tile_budget // row_bytes) // 8 * 8)

    TS0 = S0
    if S0 > max_rows:
        d = min(max_rows, (S0 // 8) * 8)
        while d >= 8:
            if S0 % d == 0:
                TS0 = d
                break
            d -= 8
        # TODO(synk): if no 8-aligned divisor exists we fall back to the full
        # plane per step (ragged-tail masking not implemented); vmem_limit is
        # raised below to cover that tile.
    NS = S0 // TS0

    nw_work = N * NS
    NC = 2 if (nw_work % 2 == 0 and nw_work >= 2) else 1
    NW = nw_work // NC

    x = bd_pre.reshape(N, C, S0, S1)  # trailing contiguous dims -> free
    t = bd_gt.reshape(N, S0, S1)

    def x_map(c, w, lab):
        idx = c * NW + w
        roi = idx // NS
        return (roi, lab[roi], idx % NS, 0)

    def t_map(c, w, lab):
        idx = c * NW + w
        return (idx // NS, idx % NS, 0)

    tile_bytes = TS0 * row_bytes
    grid_spec = pltpu.PrefetchScalarGridSpec(
        num_scalar_prefetch=1,
        grid=(NC, NW),
        in_specs=[
            pl.BlockSpec((None, None, TS0, S1), x_map),
            pl.BlockSpec((None, TS0, S1), t_map),
        ],
        out_specs=pl.BlockSpec((None, 4, S1), lambda c, w, lab: (c, 0, 0)),
        scratch_shapes=[pltpu.VMEM((4, S1), jnp.float32)],
    )
    return pl.pallas_call(
        _bce_partial_kernel,
        out_shape=jax.ShapeDtypeStruct((NC, 4, S1), jnp.float32),
        grid_spec=grid_spec,
        compiler_params=_compiler_params(tile_bytes, vmem_cap),
        cost_estimate=_cost_estimate(N * HW, xb, tb),
    )(label.astype(jnp.int32), x, t)


# ---------------------------------------------------------------------------
# Public wrapper.
# ---------------------------------------------------------------------------
def boundary_loss_pallas(bd_pre, bd_gt, label, loss_weight=1.0, *,
                         small_plane_bytes=512 * 1024):
    """Pallas-TPU weighted BCE boundary loss.

    bd_pre: (N, C, H, W) float logits (any float dtype; upcast in-kernel)
    bd_gt:  (N, H, W) binary {0, 1} targets (any numeric/bool dtype)
    label:  (N,) int channel index per ROI
    """
    N, C, H, W = bd_pre.shape
    assert bd_gt.shape == (N, H, W)
    HW = H * W

    vmem_cap = _vmem_capacity_bytes()
    # Generation-aware per-step input-tile target: ~8 MiB on 128-MiB-VMEM
    # parts (v5e/v6e), ~4 MiB on 64-MiB parts (v7x).
    tile_budget = min(8 << 20, max(1 << 20, vmem_cap // 16))

    plane_bytes = HW * jnp.dtype(bd_pre.dtype).itemsize
    if plane_bytes <= small_plane_bytes:
        partials = _partials_small(bd_pre, bd_gt, label, tile_budget, vmem_cap)
    else:
        partials = _partials_big(bd_pre, bd_gt, label, tile_budget, vmem_cap)

    # Tiny finalize in plain JAX: rows are [s_pos, s_neg, n_pos, n_neg].
    sums = jnp.sum(partials, axis=(0, 2))  # (4,)
    s_pos, s_neg, n_pos, n_neg = sums[0], sums[1], sums[2], sums[3]
    sum_num = n_pos + n_neg
    # weight[pos] = neg_num/sum_num ; weight[neg] = pos_num/sum_num ;
    # reduction='mean' divides by the total number of elements.
    weighted_sum = (n_neg / sum_num) * s_pos + (n_pos / sum_num) * s_neg
    loss = weighted_sum / jnp.float32(N * HW)
    return jnp.float32(loss_weight) * loss


class BoundaryLoss:
    """JAX/Pallas port of mmdet BoundaryLoss (no learnable parameters)."""

    def __init__(self, loss_weight: float = 1.0, loss_name: str = "loss_boundary"):
        self.loss_weight = loss_weight
        self.loss_name_ = loss_name

    def __call__(self, bd_pre, bd_gt, label):
        return boundary_loss_pallas(bd_pre, bd_gt, label, self.loss_weight)

    @property
    def loss_name(self):
        return self.loss_name_


def _reference_loss(bd_pre, bd_gt, label, loss_weight=1.0):
    """Pure-JAX reference mirroring the PyTorch weighted_bce semantics."""
    N = bd_pre.shape[0]
    sel = bd_pre[jnp.arange(N), label]  # (N, H, W)
    x = sel.reshape(1, -1).astype(jnp.float32)
    t = bd_gt.reshape(1, -1).astype(jnp.float32)
    pos = t == 1.0
    neg = t == 0.0
    pos_num = pos.sum().astype(jnp.float32)
    neg_num = neg.sum().astype(jnp.float32)
    sum_num = pos_num + neg_num
    w = jnp.where(pos, neg_num / sum_num, jnp.where(neg, pos_num / sum_num, 0.0))
    bce = jnp.maximum(x, 0.0) - x * t + jnp.log1p(jnp.exp(-jnp.abs(x)))
    return loss_weight * jnp.mean(w * bce)


if __name__ == "__main__":
    key = jax.random.PRNGKey(0)

    # ---- Test 1: canonical small shapes, both dispatch paths ----------------
    k1, k2, k3 = jax.random.split(key, 3)
    N, C, H, W = 2, 4, 16, 16
    bd_pre = jax.random.normal(k1, (N, C, H, W), dtype=jnp.float32)
    label = jax.random.randint(k2, (N,), 0, C, dtype=jnp.int32)
    bd_gt = (jax.random.uniform(k3, (N, H, W)) > 0.7).astype(jnp.float32)

    loss_mod = BoundaryLoss(loss_weight=1.0)
    loss_small = loss_mod(bd_pre, bd_gt, label)                 # gather path
    loss_big = boundary_loss_pallas(bd_pre, bd_gt, label, 1.0,
                                    small_plane_bytes=0)        # big-plane path
    jax.block_until_ready((loss_small, loss_big))
    ref = _reference_loss(bd_pre, bd_gt, label, 1.0)
    assert jnp.allclose(loss_small, ref, rtol=1e-5, atol=1e-5), (loss_small, ref)
    assert jnp.allclose(loss_big, ref, rtol=1e-5, atol=1e-5), (loss_big, ref)

    # ---- Test 2: odd N, lane-sparse fallback, bf16 logits --------------------
    k4, k5, k6 = jax.random.split(jax.random.PRNGKey(1), 3)
    N2, C2, H2, W2 = 3, 5, 8, 24
    bd_pre2 = jax.random.normal(k4, (N2, C2, H2, W2), dtype=jnp.bfloat16)
    label2 = jax.random.randint(k5, (N2,), 0, C2, dtype=jnp.int32)
    bd_gt2 = (jax.random.uniform(k6, (N2, H2, W2)) > 0.6).astype(jnp.float32)

    loss2_small = boundary_loss_pallas(bd_pre2, bd_gt2, label2, 0.5)
    loss2_big = boundary_loss_pallas(bd_pre2, bd_gt2, label2, 0.5,
                                     small_plane_bytes=0)
    jax.block_until_ready((loss2_small, loss2_big))
    ref2 = _reference_loss(bd_pre2, bd_gt2, label2, 0.5)
    assert jnp.allclose(loss2_small, ref2, rtol=1e-4, atol=1e-5), (loss2_small, ref2)
    assert jnp.allclose(loss2_big, ref2, rtol=1e-4, atol=1e-5), (loss2_big, ref2)

    print("KERNEL_OK")
</pallas_src>

<mosaic_0001>
module attributes {stable_mosaic.version = 11 : i64} {
  func.func @_bce_partial_kernel(%arg0: i32, %arg1: i32, %arg2: memref<2xi32, #tpu.memory_space<smem>>, %arg3: memref<8x128xf32, #tpu.memory_space<vmem>>, %arg4: memref<8x128xf32, #tpu.memory_space<vmem>>, %arg5: memref<1x4x128xf32, #tpu.memory_space<vmem>>, %arg6: memref<4x128xf32, #tpu.memory_space<vmem>>) attributes {dimension_semantics = [#tpu.dimension_semantics<parallel>, #tpu.dimension_semantics<arbitrary>], iteration_bounds = array<i64: 1, 1>, scalar_prefetch = 1 : i64, scratch_operands = 1 : i64, tpu.core_type = #tpu.core_type<tc>, window_params = [{transform_indices = @transform_0, window_bounds = array<i64: 8, 128>}, {transform_indices = @transform_1, window_bounds = array<i64: 8, 128>}, {transform_indices = @transform_2, window_bounds = array<i64: 1, 4, 128>}]} {
    %c0_i32 = arith.constant 0 : i32
    %0 = arith.cmpi eq, %arg1, %c0_i32 : i32
    %1 = arith.extui %0 : i1 to i32
    %c0_i32_0 = arith.constant 0 : i32
    %2 = arith.cmpi ne, %1, %c0_i32_0 : i32
    scf.if %2 {
      %cst_19 = arith.constant 0.000000e+00 : f32
      %42 = vector.broadcast %cst_19 : f32 to vector<4x128xf32>
      %c0_20 = arith.constant 0 : index
      %c0_21 = arith.constant 0 : index
      %43 = vector.load %arg6[%c0_20, %c0_21] : memref<4x128xf32, #tpu.memory_space<vmem>>, vector<4x128xf32>
      tpu.vector_store %arg6[%c0_20, %c0_21], %42 {strides = array<i32>} : memref<4x128xf32, #tpu.memory_space<vmem>>, vector<4x128xf32>,
    } else {
    }
    %c0 = arith.constant 0 : index
    %c0_1 = arith.constant 0 : index
    %3 = vector.load %arg3[%c0, %c0_1] : memref<8x128xf32, #tpu.memory_space<vmem>>, vector<8x128xf32>
    %c0_2 = arith.constant 0 : index
    %c0_3 = arith.constant 0 : index
    %4 = vector.load %arg4[%c0_2, %c0_3] : memref<8x128xf32, #tpu.memory_space<vmem>>, vector<8x128xf32>
    %cst = arith.constant 0.000000e+00 : f32
    %5 = vector.broadcast %cst : f32 to vector<8x128xf32>
    %6 = arith.maximumf %3, %5 : vector<8x128xf32>
    %7 = arith.mulf %3, %4 : vector<8x128xf32>
    %8 = arith.subf %6, %7 : vector<8x128xf32>
    %9 = math.absf %3 : vector<8x128xf32>
    %cst_4 = arith.constant 0.000000e+00 : f32
    %10 = vector.broadcast %cst_4 : f32 to vector<8x128xf32>
    %11 = arith.subf %10, %9 : vector<8x128xf32>
    %12 = math.exp %11 : vector<8x128xf32>
    %13 = math.log1p %12 : vector<8x128xf32>
    %14 = arith.addf %8, %13 : vector<8x128xf32>
    %cst_5 = arith.constant 1.000000e+00 : f32
    %15 = vector.broadcast %cst_5 : f32 to vector<8x128xf32>
    %16 = arith.cmpf oeq, %4, %15 : vector<8x128xf32>
    %cst_6 = arith.constant 0.000000e+00 : f32
    %17 = vector.broadcast %cst_6 : f32 to vector<8x128xf32>
    %18 = arith.cmpf oeq, %4, %17 : vector<8x128xf32>
    %cst_7 = arith.constant 0.000000e+00 : f32
    %19 = vector.broadcast %cst_7 : f32 to vector<8x128xf32>
    %20 = arith.select %16, %14, %19 : vector<8x128xi1>, vector<8x128xf32>
    %cst_8 = arith.constant dense<0.000000e+00> : vector<128xf32>
    %21 = vector.multi_reduction <add>, %20, %cst_8 [0] : vector<8x128xf32> to vector<128xf32>
    %22 = vector.shape_cast %21 : vector<128xf32> to vector<1x128xf32>
    %cst_9 = arith.constant 0.000000e+00 : f32
    %23 = vector.broadcast %cst_9 : f32 to vector<8x128xf32>
    %24 = arith.select %18, %14, %23 : vector<8x128xi1>, vector<8x128xf32>
    %cst_10 = arith.constant dense<0.000000e+00> : vector<128xf32>
    %25 = vector.multi_reduction <add>, %24, %cst_10 [0] : vector<8x128xf32> to vector<128xf32>
    %26 = vector.shape_cast %25 : vector<128xf32> to vector<1x128xf32>
    %27 = arith.extui %16 : vector<8x128xi1> to vector<8x128xi32>
    %28 = arith.sitofp %27 : vector<8x128xi32> to vector<8x128xf32>
    %cst_11 = arith.constant dense<0.000000e+00> : vector<128xf32>
    %29 = vector.multi_reduction <add>, %28, %cst_11 [0] : vector<8x128xf32> to vector<128xf32>
    %30 = vector.shape_cast %29 : vector<128xf32> to vector<1x128xf32>
    %31 = arith.extui %18 : vector<8x128xi1> to vector<8x128xi32>
    %32 = arith.sitofp %31 : vector<8x128xi32> to vector<8x128xf32>
    %cst_12 = arith.constant dense<0.000000e+00> : vector<128xf32>
    %33 = vector.multi_reduction <add>, %32, %cst_12 [0] : vector<8x128xf32> to vector<128xf32>
    %34 = vector.shape_cast %33 : vector<128xf32> to vector<1x128xf32>
    %c0_13 = arith.constant 0 : index
    %c0_14 = arith.constant 0 : index
    %35 = vector.load %arg6[%c0_13, %c0_14] : memref<4x128xf32, #tpu.memory_space<vmem>>, vector<4x128xf32>
    %36 = tpu.concatenate %22, %26, %30, %34 in 0 : vector<1x128xf32>, vector<1x128xf32>, vector<1x128xf32>, vector<1x128xf32> -> vector<4x128xf32>
    %37 = arith.addf %35, %36 : vector<4x128xf32>
    %c0_15 = arith.constant 0 : index
    %c0_16 = arith.constant 0 : index
    %38 = vector.load %arg6[%c0_15, %c0_16] : memref<4x128xf32, #tpu.memory_space<vmem>>, vector<4x128xf32>
    tpu.vector_store %arg6[%c0_15, %c0_16], %37 {strides = array<i32>} : memref<4x128xf32, #tpu.memory_space<vmem>>, vector<4x128xf32>,
    %c0_i32_17 = arith.constant 0 : i32
    %39 = arith.cmpi eq, %arg1, %c0_i32_17 : i32
    %40 = arith.extui %39 : i1 to i32
    %c0_i32_18 = arith.constant 0 : i32
    %41 = arith.cmpi ne, %40, %c0_i32_18 : i32
    scf.if %41 {
      %c0_19 = arith.constant 0 : index
      %c0_20 = arith.constant 0 : index
      %42 = vector.load %arg6[%c0_19, %c0_20] : memref<4x128xf32, #tpu.memory_space<vmem>>, vector<4x128xf32>
      %c0_21 = arith.constant 0 : index
      %c0_22 = arith.constant 0 : index
      %c0_23 = arith.constant 0 : index
      %43 = vector.load %arg5[%c0_21, %c0_22, %c0_23] : memref<1x4x128xf32, #tpu.memory_space<vmem>>, vector<1x4x128xf32>
      %44 = vector.shape_cast %43 : vector<1x4x128xf32> to vector<4x128xf32>
      %45 = vector.shape_cast %42 : vector<4x128xf32> to vector<1x4x128xf32>
      tpu.vector_store %arg5[%c0_21, %c0_22, %c0_23], %45 {strides = array<i32>} : memref<1x4x128xf32, #tpu.memory_space<vmem>>, vector<1x4x128xf32>,
    } else {
    }
    return
  }
  func.func @transform_0(%arg0: i32, %arg1: i32, %arg2: memref<2xi32, #tpu.memory_space<smem>>) -> (i32, i32) {
    %c1_i32 = arith.constant 1 : i32
    %0 = arith.muli %arg0, %c1_i32 : i32
    %1 = arith.addi %0, %arg1 : i32
    %c0_i32 = arith.constant 0 : i32
    %c0_i32_0 = arith.constant 0 : i32
    return %1, %c0_i32 : i32, i32
  }
  func.func @transform_1(%arg0: i32, %arg1: i32, %arg2: memref<2xi32, #tpu.memory_space<smem>>) -> (i32, i32) {
    %c1_i32 = arith.constant 1 : i32
    %0 = arith.muli %arg0, %c1_i32 : i32
    %1 = arith.addi %0, %arg1 : i32
    %c0_i32 = arith.constant 0 : i32
    %c0_i32_0 = arith.constant 0 : i32
    return %1, %c0_i32 : i32, i32
  }
  func.func @transform_2(%arg0: i32, %arg1: i32, %arg2: memref<2xi32, #tpu.memory_space<smem>>) -> (i32, i32, i32) {
    %c0_i32 = arith.constant 0 : i32
    %c0_i32_0 = arith.constant 0 : i32
    %c0_i32_1 = arith.constant 0 : i32
    return %arg0, %c0_i32, %c0_i32_0 : i32, i32, i32
  }
}

</mosaic_0001>

<llo_original>
// kernel: tpu_custom_call.1
$region0: #{tpu_custom_call.1}
  #allocation0 [shape = 'u32[]', space=smem, size = 0x4, offset = 0x4, fixed_abs, tag = 'smem constant byte address 0x4 - core index']
  #allocation1 [shape = 'u32[72,128]{1,0:T(1,128)}', space=vmem, size = 0x9000, scoped, tag = 'internal scratch']
  #allocation2 [shape = 'f32[4,128]{1,0:T(4,128)}', space=vmem, size = 0x800, scoped, tag = 'scratch operand']
  #allocation3 [shape = 's32[1]{0}', space=sflag, size = 0x4, scoped, tag = 'scoped memory for tpu_custom_call.1']
  #allocation4 [shape = 'u8[512]{0}', space=smem, size = 0x200, scoped, tag = 'prefetched SMEM operand 0']
  %s0 = inlined_call_operand.hbm [shape: s32[2], index: 0, kind: input, shape index: {}]
  %s1 = inlined_call_operand.hbm [shape: f32[8,128], index: 1, kind: input, shape index: {}]
  %s2 = inlined_call_operand.hbm [shape: f32[8,128], index: 2, kind: input, shape index: {}]
  %s3 = inlined_call_operand.hbm [shape: f32[1,4,128], index: 3, kind: output, shape index: {}]
  %s4 = sld [smem:[#allocation0]]
  $region34: #{tpu_custom_call.1} parent=0
    _
  %s6 = ssub.s32 1, %s4
  %s7 = scalar_select 0, %s6, %s4
  %s9 = sshll.u32 %s0, 4
  %s10 = int_to_ptr.hbm [resolvable:$true] %s9
  %12 = dma.hbm_to_smem %s10, 16, [#allocation4], [#allocation3]
  %14 = dma.done [#allocation3], 16
  %15 = sfence
  $region1: #{tpu_custom_call.1} parent=0
    #allocation5 [shape = 'u8[4096]{0}', space=vmem, size = 0x1000, scoped, tag = 'input window, operand 1, single buffered']
    #allocation6 [shape = 's32[1]{0}', space=sflag, size = 0x4, scoped, tag = 'scoped memory for tpu_custom_call.1']
    #allocation7 [shape = 's32[1]{0}', space=sflag, size = 0x4, scoped, tag = 'scoped memory for tpu_custom_call.1']
    #allocation8 [shape = 'u8[4096]{0}', space=vmem, size = 0x1000, scoped, tag = 'input window, operand 2, single buffered']
    #allocation9 [shape = 's32[1]{0}', space=sflag, size = 0x4, scoped, tag = 'scoped memory for tpu_custom_call.1']
    #allocation10 [shape = 'u8[2048]{0}', space=vmem, size = 0x800, scoped, tag = 'output window, operand 0, single buffered']
    %16 = vsyncpa [#allocation6], 0
    %17 = vsyncpa [#allocation9], 0
    %18 = vsyncpa [#allocation7], 0
    // Predicated region
    $region2: #{tpu_custom_call.1} parent=1 // pred_check
      _
    $region3: #{tpu_custom_call.1} parent=1 // pred_check_branch
      %20 = sbr.rel (0) target = $region5
    $region4: #{tpu_custom_call.1} parent=1 // pred_region
      %s21 = sadd.s32 0, 0
      %23 = vsyncadd [#allocation6], 0
      %s24 = smul.addr %s21, 8
      %s25 = scalar_lea.hbm %s1, %s24
      %s27 = sshll.u32 %s25, 4
      %s28 = int_to_ptr.hbm [resolvable:$true] %s27
      %s29 = sshll.u32 [#allocation5], 4
      %s30 = int_to_ptr.vmem [resolvable:$true] %s29
      %32 = dma.hbm_to_vmem [thread:$0]  %s28, 128, %s30, [#allocation6]
    $region5: #{tpu_custom_call.1} parent=1 // pred_fallthru
      _
    // Predicated region
    $region6: #{tpu_custom_call.1} parent=1 // pred_check
      _
    $region7: #{tpu_custom_call.1} parent=1 // pred_check_branch
      %34 = sbr.rel (0) target = $region9
    $region8: #{tpu_custom_call.1} parent=1 // pred_region
      %s35 = sadd.s32 0, 0
      %37 = vsyncadd [#allocation9], 0
      %s38 = smul.addr %s35, 8
      %s39 = scalar_lea.hbm %s2, %s38
      %s41 = sshll.u32 %s39, 4
      %s42 = int_to_ptr.hbm [resolvable:$true] %s41
      %s43 = sshll.u32 [#allocation8], 4
      %s44 = int_to_ptr.vmem [resolvable:$true] %s43
      %46 = dma.hbm_to_vmem [thread:$0]  %s42, 128, %s44, [#allocation9]
    $region9: #{tpu_custom_call.1} parent=1 // pred_fallthru
      _
    // Predicated region
    $region10: #{tpu_custom_call.1} parent=1 // pred_check
      _
    $region11: #{tpu_custom_call.1} parent=1 // pred_check_branch
      %48 = sbr.rel (0) target = $region13
    $region12: #{tpu_custom_call.1} parent=1 // pred_region
      %50 = dma.done [#allocation6], 128
    $region13: #{tpu_custom_call.1} parent=1 // pred_fallthru
      _
    // Predicated region
    $region14: #{tpu_custom_call.1} parent=1 // pred_check
      _
    $region15: #{tpu_custom_call.1} parent=1 // pred_check_branch
      %52 = sbr.rel (0) target = $region17
    $region16: #{tpu_custom_call.1} parent=1 // pred_region
      %54 = dma.done [#allocation9], 128
    $region17: #{tpu_custom_call.1} parent=1 // pred_fallthru
      _
    %s55 = sadd.s32 0, 0
    %s56 = sadd.s32 0, 0
    %p57 = scmp.eq.s32.totalorder 0, 0
    // Predicated region
    $region18: #{tpu_custom_call.1} parent=1 // pred_check
      %p58 = pneg %p57
    $region19: #{tpu_custom_call.1} parent=1 // pred_check_branch
      %60 = sbr.rel (%p58) target = $region21
    $region20: #{tpu_custom_call.1} parent=1 // pred_region
      %61 = vst [vmem:[#allocation2] sm:$0xf] 0.0
    $region21: #{tpu_custom_call.1} parent=1 // pred_fallthru
      _
    %v62 = vld [vmem:[#allocation5] sm:$0xff]
    %v63 = vld [vmem:[#allocation8] sm:$0xff]
    %v64 = vmax.f32 %v62, 0.0
    %v65 = vmul.f32 %v62, %v63
    %v66 = vsub.f32 %v64, %v65
    %v67 = vand.u32 2147483647, %v62
    %v68 = vsub.f32 0.0, %v67
    %v69 = vmul.f32 %v68, 1.442695
    %v70 = vpow.pop %v69
    %v71 = vadd.f32 %v70, 1.0
    %v72 = vlog2.pop %v71
    %v73 = vmul.f32 %v72, 0.6931472
    %v74 = vmul.f32 -0.5, %v70
    %v75 = vadd.f32 %v74, 1.0
    %v76 = vmul.f32 %v75, %v70
    %v77 = vand.u32 2147483647, %v70
    %vm78 = vcmp.lt.f32.partialorder %v77, 0.0004427343
    %v79 = vsel %vm78, %v76, %v73
    %v80 = vadd.f32 %v66, %v79
    %vm81 = vcmp.eq.f32.partialorder %v63, 1.0
    %vm82 = vcmp.eq.f32.partialorder %v63, 0.0
    %v83 = vsel %vm81, %v80, 0.0
    %v84 = vrot.slane %v83, 4
    %v85 = vadd.f32 %v83, %v84
    %v86 = vrot.slane %v85, 2
    %v87 = vadd.f32 %v85, %v86
    %v88 = vrot.slane %v87, 1
    %v89 = vadd.f32 %v87, %v88
    %v90 = vsel %vm82, %v80, 0.0
    %v91 = vrot.slane %v90, 4
    %v92 = vadd.f32 %v90, %v91
    %v93 = vrot.slane %v92, 2
    %v94 = vadd.f32 %v92, %v93
    %v95 = vrot.slane %v94, 1
    %v96 = vadd.f32 %v94, %v95
    %v97 = vsel %vm81, 1, 0
    %v98 = vcvt.s32.f32 %v97
    %v99 = vrot.slane %v98, 4
    %v100 = vadd.f32 %v98, %v99
    %v101 = vrot.slane %v100, 2
    %v102 = vadd.f32 %v100, %v101
    %v103 = vrot.slane %v102, 1
    %v104 = vadd.f32 %v102, %v103
    %v105 = vsel %vm82, 1, 0
    %v106 = vcvt.s32.f32 %v105
    %v107 = vrot.slane %v106, 4
    %v108 = vadd.f32 %v106, %v107
    %v109 = vrot.slane %v108, 2
    %v110 = vadd.f32 %v108, %v109
    %v111 = vrot.slane %v110, 1
    %v112 = vadd.f32 %v110, %v111
    %v113 = vld [vmem:[#allocation2] sm:$0xf]
    %vm114 = vcmask 1040384
    %v115 = vsel %vm114, %v89, %v96
    %vm116 = vcmask 1041408
    %v117 = vsel %vm116, %v115, %v104
    %vm118 = vcmask 1042432
    %v119 = vsel %vm118, %v117, %v112
    %v120 = vadd.f32 %v113, %v119
    %121 = vst [vmem:[#allocation2] sm:$0xf] %v120
    // Predicated region
    $region22: #{tpu_custom_call.1} parent=1 // pred_check
      %p122 = pneg %p57
    $region23: #{tpu_custom_call.1} parent=1 // pred_check_branch
      %124 = sbr.rel (%p122) target = $region25
    $region24: #{tpu_custom_call.1} parent=1 // pred_region
      %v125 = vld [vmem:[#allocation2] sm:$0xf]
      %126 = vst [vmem:[#allocation10] sm:$0xf] %v125
    $region25: #{tpu_custom_call.1} parent=1 // pred_fallthru
      _
    // Predicated region
    $region26: #{tpu_custom_call.1} parent=1 // pred_check
      _
    $region27: #{tpu_custom_call.1} parent=1 // pred_check_branch
      %128 = sbr.rel (0) target = $region29
    $region28: #{tpu_custom_call.1} parent=1 // pred_region
      %130 = vsyncadd [#allocation7], 0
      %s132 = sshll.u32 [#allocation10], 4
      %s133 = int_to_ptr.vmem [resolvable:$true] %s132
      %s134 = sshll.u32 %s3, 4
      %s135 = int_to_ptr.hbm [resolvable:$true] %s134
      %137 = dma.vmem_to_hbm [thread:$0]  %s133, 64, %s135, [#allocation7]
    $region29: #{tpu_custom_call.1} parent=1 // pred_fallthru
      _
    // Predicated region
    $region30: #{tpu_custom_call.1} parent=1 // pred_check
      _
    $region31: #{tpu_custom_call.1} parent=1 // pred_check_branch
      %139 = sbr.rel (0) target = $region33
    $region32: #{tpu_custom_call.1} parent=1 // pred_region
      %141 = dma.done [#allocation7], 64
    $region33: #{tpu_custom_call.1} parent=1 // pred_fallthru
      _
    %142 = vsyncpa [#allocation6], 1
    %143 = vsyncpa [#allocation9], 1
    %144 = vsyncpa [#allocation7], 1

</llo_original>
